<compile_context>
chip_gen: v7x
topology: tpu7x:2x2x1
jax: 0.10.0
libtpu: 0.0.40
codegen_flags: <defaults>
</compile_context>

<pallas_src>
import functools

import jax
import jax.numpy as jnp
from jax.experimental import pallas as pl
from jax.experimental.pallas import tpu as pltpu

_LANES = 128
_SUBLANES = 8
_MAX_TILE_ROWS = 8192            # 4 MiB per f32 input buffer per pipeline slot
_CHUNK_ROWS = 512                # inner-loop chunk: keeps VMEM temps < 1 MiB
_VMEM_LIMIT_BYTES = 32 * 1024 * 1024
_MIN_PALLAS_ELEMS = 65536        # below this, a fused XLA reduction is faster


def _tensorcores_per_device():
    """Return 2 on v7x-class parts (2 TensorCores/chip), else 1 (v5e/v6e)."""
    try:
        dev = jax.devices()[0]
        if dev.platform != "tpu":
            return 1
        kind = (getattr(dev, "device_kind", "") or "").lower()
        if "v7" in kind or "7x" in kind:
            return 2
    except Exception:
        pass
    return 1


def _l1l2_kernel(p_ref, t_ref, out_ref, *, rows, tile_rows, chunk_rows,
                 blocks_per_shard, two_d_grid, any_tail):
    # out_ref block: (1, 2, 8, 128) f32, resident across the "arbitrary" axis.
    #   [0, 0] accumulates |d| partial sums, [0, 1] accumulates d^2.
    if two_d_grid:
        shard = pl.program_id(0)
        step = pl.program_id(1)
        blk = shard * blocks_per_shard + step
    else:
        step = pl.program_id(0)
        blk = step

    @pl.when(step == 0)
    def _():
        out_ref[...] = jnp.zeros_like(out_ref)

    n_chunks = tile_rows // chunk_rows

    def accumulate(masked):
        def body(i, carry):
            a_acc, s_acc = carry
            off = pl.multiple_of(i * chunk_rows, chunk_rows)
            d = (p_ref[pl.ds(off, chunk_rows), :].astype(jnp.float32)
                 - t_ref[pl.ds(off, chunk_rows), :].astype(jnp.float32))
            if masked:
                # Zero out rows past the valid range (ragged last block and
                # phantom blocks introduced by an uneven 2-core split).
                row_ids = (blk * tile_rows + off
                           + jax.lax.broadcasted_iota(jnp.int32, d.shape, 0))
                d = jnp.where(row_ids < rows, d, 0.0)
            # Fold (chunk_rows, 128) down to one (8, 128) vreg per statistic;
            # the reshape only splits the sublane-major axis (pure VPU adds).
            a_acc = a_acc + jnp.abs(d).reshape(-1, _SUBLANES, _LANES).sum(axis=0)
            s_acc = s_acc + (d * d).reshape(-1, _SUBLANES, _LANES).sum(axis=0)
            return a_acc, s_acc

        zeros = jnp.zeros((_SUBLANES, _LANES), jnp.float32)
        a_sum, s_sum = jax.lax.fori_loop(0, n_chunks, body, (zeros, zeros))
        out_ref[0, 0] += a_sum
        out_ref[0, 1] += s_sum

    if any_tail:
        is_tail = (blk + 1) * tile_rows > rows

        @pl.when(jnp.logical_not(is_tail))
        def _():
            accumulate(masked=False)

        @pl.when(is_tail)
        def _():
            accumulate(masked=True)
    else:
        accumulate(masked=False)


def l1_and_l2_loss(pred, true, l1_ratio=0.5, l2_ratio=0.5, *,
                   min_pallas_elems=_MIN_PALLAS_ELEMS):
    """l1_ratio * mean(|pred-true|) + l2_ratio * mean((pred-true)^2),
    matching nn.L1Loss() / nn.MSELoss() with default 'mean' reduction."""
    assert pred.shape == true.shape, "pred/true must have the same shape"
    n_elems = pred.size
    inv_n = 1.0 / float(n_elems)

    # Tiny inputs: kernel-launch fixed cost dominates; use fused XLA instead.
    if n_elems < min_pallas_elems:
        d = (pred.astype(jnp.float32).reshape(-1)
             - true.astype(jnp.float32).reshape(-1))
        return (l1_ratio * (jnp.sum(jnp.abs(d)) * inv_n)
                + l2_ratio * (jnp.sum(d * d) * inv_n))

    # Flatten in native dtype (in-kernel upcast rides the VPU for free).
    flat_p = pred.reshape(-1)
    flat_t = true.reshape(-1)

    # Pad so the slab is (rows, 128) with rows a multiple of the packed
    # sublane granularity (8 for f32, 16 for bf16, 32 for 1-byte dtypes).
    # Zero padding contributes 0 to both sums; we divide by the true count.
    itemsize = max(int(jnp.dtype(pred.dtype).itemsize), 1)
    sub_mult = _SUBLANES * max(1, 4 // itemsize)
    chunk = sub_mult * _LANES
    padded = ((n_elems + chunk - 1) // chunk) * chunk
    if padded != n_elems:
        flat_p = jnp.pad(flat_p, (0, padded - n_elems))
        flat_t = jnp.pad(flat_t, (0, padded - n_elems))
    rows = padded // _LANES
    p2d = flat_p.reshape(rows, _LANES)
    t2d = flat_t.reshape(rows, _LANES)

    tile_rows = rows if rows <= _MAX_TILE_ROWS else _MAX_TILE_ROWS
    chunk_rows = tile_rows if tile_rows <= _CHUNK_ROWS else _CHUNK_ROWS
    blocks_total = pl.cdiv(rows, tile_rows)

    # Shard the block range across TensorCores only on 2-TC parts (v7x).
    num_shards = 2 if (_tensorcores_per_device() == 2 and blocks_total >= 2) else 1
    blocks_per_shard = pl.cdiv(blocks_total, num_shards)
    # Tail handling needed if the last real block overhangs, or an uneven
    # 2-core split creates phantom blocks (masked to zero in-kernel).
    any_tail = (rows % tile_rows != 0) or (num_shards * blocks_per_shard != blocks_total)
    last_block = blocks_total - 1
    two_d_grid = num_shards > 1

    kernel = functools.partial(
        _l1l2_kernel,
        rows=rows,
        tile_rows=tile_rows,
        chunk_rows=chunk_rows,
        blocks_per_shard=blocks_per_shard,
        two_d_grid=two_d_grid,
        any_tail=any_tail,
    )

    if two_d_grid:
        grid = (num_shards, blocks_per_shard)
        # Clamp so phantom blocks re-read the last valid block (never OOB DMA);
        # their contribution is fully masked off in the kernel.
        in_map = lambda c, s: (jnp.minimum(c * blocks_per_shard + s, last_block), 0)
        out_map = lambda c, s: (c, 0, 0, 0)
        dims = (getattr(pltpu, "CORE_PARALLEL", "parallel"),
                getattr(pltpu, "ARBITRARY", "arbitrary"))
    else:
        grid = (blocks_total,)
        in_map = lambda s: (s, 0)
        out_map = lambda s: (0, 0, 0, 0)
        dims = (getattr(pltpu, "ARBITRARY", "arbitrary"),)

    parts = pl.pallas_call(
        kernel,
        out_shape=jax.ShapeDtypeStruct(
            (num_shards, 2, _SUBLANES, _LANES), jnp.float32),
        grid_spec=pltpu.PrefetchScalarGridSpec(
            num_scalar_prefetch=0,
            grid=grid,
            in_specs=[
                pl.BlockSpec((tile_rows, _LANES), in_map),
                pl.BlockSpec((tile_rows, _LANES), in_map),
            ],
            # Per-shard resident accumulator: block index depends only on the
            # core-parallel axis, constant across the reduction axis.
            out_specs=pl.BlockSpec((1, 2, _SUBLANES, _LANES), out_map),
        ),
        compiler_params=pltpu.CompilerParams(
            dimension_semantics=dims,
            vmem_limit_bytes=_VMEM_LIMIT_BYTES),
    )(p2d, t2d)

    # Tiny final cross-lane reduction + weighted combine fuse into one XLA op.
    abs_sum = jnp.sum(parts[:, 0])
    sq_sum = jnp.sum(parts[:, 1])
    return l1_ratio * (abs_sum * inv_n) + l2_ratio * (sq_sum * inv_n)


if __name__ == "__main__":
    key = jax.random.PRNGKey(0)
    k1, k2, k3, k4 = jax.random.split(key, 4)

    # Shapes consistent with a typical NCHW prediction/target pair.
    pred = jax.random.normal(k1, (2, 4, 16, 16), dtype=jnp.float32)
    true = jax.random.normal(k2, (2, 4, 16, 16), dtype=jnp.float32)
    # Force the Pallas path (auto path short-circuits tiny inputs to XLA).
    loss = jax.block_until_ready(l1_and_l2_loss(pred, true, min_pallas_elems=0))
    d = pred - true
    ref = 0.5 * jnp.mean(jnp.abs(d)) + 0.5 * jnp.mean(d * d)
    assert jnp.allclose(loss, ref, rtol=1e-5, atol=1e-5), (loss, ref)

    # Odd element count exercises the wrapper-side zero-padding path.
    pred2 = jax.random.normal(k3, (2, 3, 17, 19), dtype=jnp.float32)
    true2 = jax.random.normal(k4, (2, 3, 17, 19), dtype=jnp.float32)
    loss2 = jax.block_until_ready(l1_and_l2_loss(pred2, true2, min_pallas_elems=0))
    d2 = pred2 - true2
    ref2 = 0.5 * jnp.mean(jnp.abs(d2)) + 0.5 * jnp.mean(d2 * d2)
    assert jnp.allclose(loss2, ref2, rtol=1e-5, atol=1e-5), (loss2, ref2)

    print("KERNEL_OK")
</pallas_src>

<mosaic_0001>
module attributes {stable_mosaic.version = 11 : i64} {
  func.func @_l1l2_kernel(%arg0: i32, %arg1: memref<16x128xf32, #tpu.memory_space<vmem>>, %arg2: memref<16x128xf32, #tpu.memory_space<vmem>>, %arg3: memref<1x2x8x128xf32, #tpu.memory_space<vmem>>) attributes {dimension_semantics = [#tpu.dimension_semantics<arbitrary>], iteration_bounds = array<i64: 1>, scalar_prefetch = 0 : i64, scratch_operands = 0 : i64, tpu.core_type = #tpu.core_type<tc>, window_params = [{transform_indices = @transform_0, window_bounds = array<i64: 16, 128>}, {transform_indices = @transform_1, window_bounds = array<i64: 16, 128>}, {pipeline_mode = #tpu.pipeline_mode<synchronous>, transform_indices = @transform_2, window_bounds = array<i64: 1, 2, 8, 128>}]} {
    %c0_i32 = arith.constant 0 : i32
    %0 = arith.cmpi eq, %arg0, %c0_i32 : i32
    %1 = arith.extui %0 : i1 to i32
    %c0_i32_0 = arith.constant 0 : i32
    %2 = arith.cmpi ne, %1, %c0_i32_0 : i32
    scf.if %2 {
      %cst_20 = arith.constant 0.000000e+00 : f32
      %31 = vector.broadcast %cst_20 : f32 to vector<1x2x8x128xf32>
      %c0_21 = arith.constant 0 : index
      %c0_22 = arith.constant 0 : index
      %c0_23 = arith.constant 0 : index
      %c0_24 = arith.constant 0 : index
      %32 = vector.load %arg3[%c0_21, %c0_22, %c0_23, %c0_24] : memref<1x2x8x128xf32, #tpu.memory_space<vmem>>, vector<1x2x8x128xf32>
      tpu.vector_store %arg3[%c0_21, %c0_22, %c0_23, %c0_24], %31 {strides = array<i32>} : memref<1x2x8x128xf32, #tpu.memory_space<vmem>>, vector<1x2x8x128xf32>,
    } else {
    }
    %cst = arith.constant 0.000000e+00 : f32
    %3 = vector.broadcast %cst : f32 to vector<8x128xf32>
    %c0_i32_1 = arith.constant 0 : i32
    %c16_i32 = arith.constant 16 : i32
    %4 = arith.muli %c0_i32_1, %c16_i32 : i32
    %5 = tpu.assume_multiple %4, 16 : i32
    %6 = arith.index_cast %5 : i32 to index
    %c0 = arith.constant 0 : index
    %7 = vector.load %arg1[%6, %c0] : memref<16x128xf32, #tpu.memory_space<vmem>>, vector<16x128xf32>
    %8 = arith.index_cast %5 : i32 to index
    %c0_2 = arith.constant 0 : index
    %9 = vector.load %arg2[%8, %c0_2] : memref<16x128xf32, #tpu.memory_space<vmem>>, vector<16x128xf32>
    %10 = arith.subf %7, %9 : vector<16x128xf32>
    %11 = math.absf %10 : vector<16x128xf32>
    %12 = vector.shape_cast %11 : vector<16x128xf32> to vector<2x8x128xf32>
    %cst_3 = arith.constant dense<0.000000e+00> : vector<8x128xf32>
    %13 = vector.multi_reduction <add>, %12, %cst_3 [0] : vector<2x8x128xf32> to vector<8x128xf32>
    %14 = arith.addf %3, %13 : vector<8x128xf32>
    %15 = arith.mulf %10, %10 : vector<16x128xf32>
    %16 = vector.shape_cast %15 : vector<16x128xf32> to vector<2x8x128xf32>
    %cst_4 = arith.constant dense<0.000000e+00> : vector<8x128xf32>
    %17 = vector.multi_reduction <add>, %16, %cst_4 [0] : vector<2x8x128xf32> to vector<8x128xf32>
    %18 = arith.addf %3, %17 : vector<8x128xf32>
    %c1_i32 = arith.constant 1 : i32
    %c0_5 = arith.constant 0 : index
    %c0_6 = arith.constant 0 : index
    %c0_7 = arith.constant 0 : index
    %c0_8 = arith.constant 0 : index
    %19 = vector.load %arg3[%c0_5, %c0_6, %c0_7, %c0_8] : memref<1x2x8x128xf32, #tpu.memory_space<vmem>>, vector<1x1x8x128xf32>
    %20 = vector.shape_cast %19 : vector<1x1x8x128xf32> to vector<8x128xf32>
    %21 = arith.addf %20, %14 : vector<8x128xf32>
    %c0_9 = arith.constant 0 : index
    %c0_10 = arith.constant 0 : index
    %c0_11 = arith.constant 0 : index
    %c0_12 = arith.constant 0 : index
    %22 = vector.load %arg3[%c0_9, %c0_10, %c0_11, %c0_12] : memref<1x2x8x128xf32, #tpu.memory_space<vmem>>, vector<1x1x8x128xf32>
    %23 = vector.shape_cast %22 : vector<1x1x8x128xf32> to vector<8x128xf32>
    %24 = vector.shape_cast %21 : vector<8x128xf32> to vector<1x1x8x128xf32>
    tpu.vector_store %arg3[%c0_9, %c0_10, %c0_11, %c0_12], %24 {strides = array<i32>} : memref<1x2x8x128xf32, #tpu.memory_space<vmem>>, vector<1x1x8x128xf32>,
    %c0_13 = arith.constant 0 : index
    %c1 = arith.constant 1 : index
    %c0_14 = arith.constant 0 : index
    %c0_15 = arith.constant 0 : index
    %25 = vector.load %arg3[%c0_13, %c1, %c0_14, %c0_15] : memref<1x2x8x128xf32, #tpu.memory_space<vmem>>, vector<1x1x8x128xf32>
    %26 = vector.shape_cast %25 : vector<1x1x8x128xf32> to vector<8x128xf32>
    %27 = arith.addf %26, %18 : vector<8x128xf32>
    %c0_16 = arith.constant 0 : index
    %c1_17 = arith.constant 1 : index
    %c0_18 = arith.constant 0 : index
    %c0_19 = arith.constant 0 : index
    %28 = vector.load %arg3[%c0_16, %c1_17, %c0_18, %c0_19] : memref<1x2x8x128xf32, #tpu.memory_space<vmem>>, vector<1x1x8x128xf32>
    %29 = vector.shape_cast %28 : vector<1x1x8x128xf32> to vector<8x128xf32>
    %30 = vector.shape_cast %27 : vector<8x128xf32> to vector<1x1x8x128xf32>
    tpu.vector_store %arg3[%c0_16, %c1_17, %c0_18, %c0_19], %30 {strides = array<i32>} : memref<1x2x8x128xf32, #tpu.memory_space<vmem>>, vector<1x1x8x128xf32>,
    return
  }
  func.func @transform_0(%arg0: i32) -> (i32, i32) {
    %c0_i32 = arith.constant 0 : i32
    %c0_i32_0 = arith.constant 0 : i32
    return %arg0, %c0_i32 : i32, i32
  }
  func.func @transform_1(%arg0: i32) -> (i32, i32) {
    %c0_i32 = arith.constant 0 : i32
    %c0_i32_0 = arith.constant 0 : i32
    return %arg0, %c0_i32 : i32, i32
  }
  func.func @transform_2(%arg0: i32) -> (i32, i32, i32, i32) {
    %c0_i32 = arith.constant 0 : i32
    %c0_i32_0 = arith.constant 0 : i32
    %c0_i32_1 = arith.constant 0 : i32
    %c0_i32_2 = arith.constant 0 : i32
    %c0_i32_3 = arith.constant 0 : i32
    return %c0_i32, %c0_i32_0, %c0_i32_1, %c0_i32_2 : i32, i32, i32, i32
  }
}

</mosaic_0001>

<llo_original>
// kernel: tpu_custom_call.1
$region0: #{tpu_custom_call.1}
  #allocation0 [shape = 'u32[]', space=smem, size = 0x4, offset = 0x4, fixed_abs, tag = 'smem constant byte address 0x4 - core index']
  #allocation1 [shape = 'u32[144,128]{1,0:T(1,128)}', space=vmem, size = 0x12000, scoped, tag = 'internal scratch']
  %s0 = inlined_call_operand.hbm [shape: f32[16,128], index: 0, kind: input, shape index: {}]
  %s1 = inlined_call_operand.hbm [shape: f32[16,128], index: 1, kind: input, shape index: {}]
  %s2 = inlined_call_operand.hbm [shape: f32[1,2,8,128], index: 2, kind: output, shape index: {}]
  %s3 = sld [smem:[#allocation0]]
  $region30: #{tpu_custom_call.1} parent=0
    _
  %s5 = ssub.s32 1, %s3
  %s6 = scalar_select 0, %s5, %s3
  $region1: #{tpu_custom_call.1} parent=0
    #allocation2 [shape = 'u8[8192]{0}', space=vmem, size = 0x2000, scoped, tag = 'input window, operand 0, single buffered']
    #allocation3 [shape = 's32[1]{0}', space=sflag, size = 0x4, scoped, tag = 'scoped memory for tpu_custom_call.1']
    #allocation4 [shape = 's32[1]{0}', space=sflag, size = 0x4, scoped, tag = 'scoped memory for tpu_custom_call.1']
    #allocation5 [shape = 'u8[8192]{0}', space=vmem, size = 0x2000, scoped, tag = 'input window, operand 1, single buffered']
    #allocation6 [shape = 's32[1]{0}', space=sflag, size = 0x4, scoped, tag = 'scoped memory for tpu_custom_call.1']
    #allocation7 [shape = 'u8[8192]{0}', space=vmem, size = 0x2000, scoped, tag = 'output window, operand 0, single buffered']
    %7 = vsyncpa [#allocation3], 0
    %8 = vsyncpa [#allocation6], 0
    %9 = vsyncpa [#allocation4], 0
    // Predicated region
    $region2: #{tpu_custom_call.1} parent=1 // pred_check
      _
    $region3: #{tpu_custom_call.1} parent=1 // pred_check_branch
      %11 = sbr.rel (0) target = $region5
    $region4: #{tpu_custom_call.1} parent=1 // pred_region
      %s13 = ssub.s32 256, 256
      %14 = vsyncadd [#allocation3], %s13
      %s15 = sshll.u32 [#allocation2], 4
      %s16 = int_to_ptr.vmem [resolvable:$true] %s15
      %21 = dma.hbm_to_vmem [thread:$0]  %s0, 256, %s16, [#allocation3], 128, 128, 8
    $region5: #{tpu_custom_call.1} parent=1 // pred_fallthru
      _
    // Predicated region
    $region6: #{tpu_custom_call.1} parent=1 // pred_check
      _
    $region7: #{tpu_custom_call.1} parent=1 // pred_check_branch
      %23 = sbr.rel (0) target = $region9
    $region8: #{tpu_custom_call.1} parent=1 // pred_region
      %s25 = ssub.s32 256, 256
      %26 = vsyncadd [#allocation6], %s25
      %s27 = sshll.u32 [#allocation5], 4
      %s28 = int_to_ptr.vmem [resolvable:$true] %s27
      %33 = dma.hbm_to_vmem [thread:$0]  %s1, 256, %s28, [#allocation6], 128, 128, 8
    $region9: #{tpu_custom_call.1} parent=1 // pred_fallthru
      _
    // Predicated region
    $region10: #{tpu_custom_call.1} parent=1 // pred_check
      _
    $region11: #{tpu_custom_call.1} parent=1 // pred_check_branch
      %35 = sbr.rel (0) target = $region13
    $region12: #{tpu_custom_call.1} parent=1 // pred_region
      %36 = dma.done [#allocation3], 256
    $region13: #{tpu_custom_call.1} parent=1 // pred_fallthru
      _
    // Predicated region
    $region14: #{tpu_custom_call.1} parent=1 // pred_check
      _
    $region15: #{tpu_custom_call.1} parent=1 // pred_check_branch
      %38 = sbr.rel (0) target = $region17
    $region16: #{tpu_custom_call.1} parent=1 // pred_region
      %39 = dma.done [#allocation6], 256
    $region17: #{tpu_custom_call.1} parent=1 // pred_fallthru
      _
    %p40 = scmp.eq.s32.totalorder 0, 0
    // Predicated region
    $region18: #{tpu_custom_call.1} parent=1 // pred_check
      %p41 = pneg %p40
    $region19: #{tpu_custom_call.1} parent=1 // pred_check_branch
      %43 = sbr.rel (%p41) target = $region21
    $region20: #{tpu_custom_call.1} parent=1 // pred_region
      %44 = vst [vmem:[#allocation7] sm:$0xff] 0.0
      %45 = vst [vmem:[#allocation7 + $0x8] sm:$0xff] 0.0
    $region21: #{tpu_custom_call.1} parent=1 // pred_fallthru
      _
    %v46 = vld [vmem:[#allocation2] sm:$0xff]
    %v47 = vld [vmem:[#allocation2 + $0x8] sm:$0xff]
    %v48 = vld [vmem:[#allocation5] sm:$0xff]
    %v49 = vld [vmem:[#allocation5 + $0x8] sm:$0xff]
    %v50 = vsub.f32 %v46, %v48
    %v51 = vsub.f32 %v47, %v49
    %v52 = vand.u32 2147483647, %v50
    %v53 = vand.u32 2147483647, %v51
    %v54 = vadd.f32 %v52, %v53
    %v55 = vadd.f32 %v54, 0.0
    %v56 = vmul.f32 %v50, %v50
    %v57 = vmul.f32 %v51, %v51
    %v58 = vadd.f32 %v56, %v57
    %v59 = vadd.f32 %v58, 0.0
    %v60 = vld [vmem:[#allocation7] sm:$0xff]
    %v61 = vadd.f32 %v60, %v55
    %62 = vst [vmem:[#allocation7] sm:$0xff] %v61
    %s63 = scalar_lea.vmem [#allocation7], 8
    %v64 = vld [vmem:[%s63] sm:$0xff]
    %v65 = vadd.f32 %v64, %v59
    %66 = vst [vmem:[%s63] sm:$0xff] %v65
    // Predicated region
    $region22: #{tpu_custom_call.1} parent=1 // pred_check
      _
    $region23: #{tpu_custom_call.1} parent=1 // pred_check_branch
      %68 = sbr.rel (0) target = $region25
    $region24: #{tpu_custom_call.1} parent=1 // pred_region
      %s70 = ssub.s32 256, 256
      %71 = vsyncadd [#allocation4], %s70
      %s72 = sshll.u32 [#allocation7], 4
      %s73 = int_to_ptr.vmem [resolvable:$true] %s72
      %78 = dma.vmem_to_hbm [thread:$0]  %s73, 256, %s2, [#allocation4], 128, 128, 8
    $region25: #{tpu_custom_call.1} parent=1 // pred_fallthru
      _
    // Predicated region
    $region26: #{tpu_custom_call.1} parent=1 // pred_check
      _
    $region27: #{tpu_custom_call.1} parent=1 // pred_check_branch
      %80 = sbr.rel (0) target = $region29
    $region28: #{tpu_custom_call.1} parent=1 // pred_region
      %81 = dma.done [#allocation4], 256
    $region29: #{tpu_custom_call.1} parent=1 // pred_fallthru
      _
    %82 = vsyncpa [#allocation3], 1
    %83 = vsyncpa [#allocation6], 1
    %84 = vsyncpa [#allocation4], 1

</llo_original>
